<compile_context>
chip_gen: v7x
topology: tpu7x:2x2x1
jax: 0.10.0
libtpu: 0.0.40
codegen_flags: <defaults>
</compile_context>

<pallas_src>
import jax
import jax.numpy as jnp
from jax import lax
from jax.experimental import pallas as pl
from jax.experimental.pallas import tpu as pltpu


# ----------------------------- Pallas kernels ------------------------------

def make_embed_prenet_kernel(n_layers, num_char):
    # ids_ref: (N, 1) int32; table_ref: (V, E) bf16; then n_layers * (W bf16, b f32); out (N, C) f32.
    def kernel(ids_ref, table_ref, *args):
        out_ref = args[-1]
        wb = args[:-1]
        n = ids_ref.shape[0]
        ids = ids_ref[...]                                          # (N, 1) int32
        iota = lax.broadcasted_iota(jnp.int32, (n, num_char), 1)    # (N, V)
        onehot = (iota == ids).astype(jnp.float32).astype(jnp.bfloat16)
        x = jnp.dot(onehot, table_ref[...],
                    preferred_element_type=jnp.float32)             # (N, E) f32
        for li in range(n_layers):                                  # Prenet: Linear -> ReLU (x2)
            w = wb[2 * li][...]
            b = wb[2 * li + 1][...]
            x = jnp.dot(x.astype(jnp.bfloat16), w,
                        preferred_element_type=jnp.float32) + b
            x = jnp.maximum(x, 0.0)
        # TODO(synk): train-mode dropout (p=0.5) not implemented; eval-mode identity used.
        out_ref[...] = x
    return kernel


def make_cbhg_kernel(T, C, K, n_hw):
    # Per-batch-element fused CBHG conv bank + maxpool + projections + residual
    # + highways + hoisted GRU input projection. Output tile: (1, T, 6H), H == C.
    p_max = K // 2

    def kernel(x_ref, bw_ref, bs_ref, bsh_ref,
               p1w_ref, p1s_ref, p1sh_ref,
               p2w_ref, p2s_ref, p2sh_ref,
               hww_ref, hwb_ref, wih_ref, bih_ref, o_ref):
        x = x_ref[0]                                                # (T, C) f32
        xb = x.astype(jnp.bfloat16)
        zpad = jnp.zeros((p_max, C), jnp.bfloat16)
        xp = jnp.concatenate([zpad, xb, zpad], axis=0)              # in-kernel padding

        # ---- conv bank: k = 1..K, taps as shifted matmuls, one pass over VMEM input
        outs = []
        tap = 0
        for k in range(1, K + 1):
            off = p_max - (k // 2)
            acc = jnp.zeros((T, C), jnp.float32)
            for dk in range(k):
                acc = acc + jnp.dot(xp[off + dk:off + dk + T, :], bw_ref[tap],
                                    preferred_element_type=jnp.float32)
                tap += 1
            outs.append(acc)
        y = jnp.concatenate(outs, axis=-1)                          # (T, K*C)
        y = jnp.maximum(y * bs_ref[...] + bsh_ref[...], 0.0)        # folded BN + ReLU

        # ---- MaxPool1d(2, 1, padding=1)[..., :T] done in-register (values >= 0)
        prev = jnp.concatenate([y[:1], y[:-1]], axis=0)
        y = jnp.maximum(y, prev)

        # ---- proj1: Conv1d(k=3, pad=1) -> BN -> ReLU
        yb = y.astype(jnp.bfloat16)
        z1 = jnp.zeros((1, K * C), jnp.bfloat16)
        yp = jnp.concatenate([z1, yb, z1], axis=0)
        acc = jnp.zeros((T, C), jnp.float32)
        for dk in range(3):
            acc = acc + jnp.dot(yp[dk:dk + T, :], p1w_ref[dk],
                                preferred_element_type=jnp.float32)
        y = jnp.maximum(acc * p1s_ref[...] + p1sh_ref[...], 0.0)

        # ---- proj2: Conv1d(k=3, pad=1) -> BN (no activation)
        yb = y.astype(jnp.bfloat16)
        z2 = jnp.zeros((1, C), jnp.bfloat16)
        yp = jnp.concatenate([z2, yb, z2], axis=0)
        acc = jnp.zeros((T, C), jnp.float32)
        for dk in range(3):
            acc = acc + jnp.dot(yp[dk:dk + T, :], p2w_ref[dk],
                                preferred_element_type=jnp.float32)
        y = acc * p2s_ref[...] + p2sh_ref[...]

        # ---- residual with CBHG input (projections[-1] == in_dim -> no pre_highway)
        y = y + x

        # ---- highway stack: merged (C, 2C) weight -> one matmul per layer
        for i in range(n_hw):
            ht = jnp.dot(y.astype(jnp.bfloat16), hww_ref[i],
                         preferred_element_type=jnp.float32) + hwb_ref[i]
            h = jnp.maximum(ht[:, :C], 0.0)
            t = jax.nn.sigmoid(ht[:, C:])
            y = h * t + y * (1.0 - t)

        # ---- GRU input projection hoisted out of the recurrence (lane-dense 6H output)
        gx = jnp.dot(y.astype(jnp.bfloat16), wih_ref[...],
                     preferred_element_type=jnp.float32) + bih_ref[...]
        o_ref[0] = gx
    return kernel


def make_bigru_kernel(T, B, H):
    # Bidirectional GRU recurrence (PyTorch gate order r, z, n), both directions
    # interleaved per step; single block-diagonal (2H, 6H) hidden matmul / step.
    def kernel(gx_ref, whh_ref, bhh_ref, of_ref, ob_ref, h_ref):
        h_ref[...] = jnp.zeros_like(h_ref)
        bhh = jnp.broadcast_to(bhh_ref[...], (B, 6 * H))            # hoisted broadcast

        def cell(gx_d, gh_d, h_d):
            r = jax.nn.sigmoid(gx_d[:, :H] + gh_d[:, :H])
            z = jax.nn.sigmoid(gx_d[:, H:2 * H] + gh_d[:, H:2 * H])
            n = jnp.tanh(gx_d[:, 2 * H:3 * H] + r * gh_d[:, 2 * H:3 * H])
            return (1.0 - z) * n + z * h_d

        def step(t, c):
            tb = T - 1 - t
            h_all = h_ref[...]                                      # (B, 2H) f32
            gh = jnp.dot(h_all.astype(jnp.bfloat16), whh_ref[...],
                         preferred_element_type=jnp.float32) + bhh  # (B, 6H)
            gx_f = gx_ref[t]                                        # (B, 6H)
            gx_b = gx_ref[tb]
            hf_new = cell(gx_f[:, :3 * H], gh[:, :3 * H], h_all[:, :H])
            hb_new = cell(gx_b[:, 3 * H:], gh[:, 3 * H:], h_all[:, H:])
            h_ref[...] = jnp.concatenate([hf_new, hb_new], axis=1)
            of_ref[t] = hf_new
            ob_ref[tb] = hb_new
            return c

        lax.fori_loop(0, T, step, 0)
    return kernel


# ------------------------------ wrappers ------------------------------------

def embed_prenet(ids_flat, table, prenet_weights):
    n = ids_flat.shape[0]
    num_char = table.shape[0]
    out_c = prenet_weights[-1][0].shape[1]
    args = [ids_flat.reshape(n, 1).astype(jnp.int32), table]
    for (w, b) in prenet_weights:
        args += [w, b]
    return pl.pallas_call(
        make_embed_prenet_kernel(len(prenet_weights), num_char),
        out_shape=jax.ShapeDtypeStruct((n, out_c), jnp.float32),
    )(*args)


def cbhg_gru_input(prenet_out, cp):
    # prenet_out: (B, T, C) -> gx: (B, T, 6H) (GRU input projection already applied)
    B, T, C = prenet_out.shape
    K = cp["K"]
    n_hw = cp["hw_w"].shape[0]
    H6 = cp["gru_wih"].shape[1]
    arrays = [cp["bank_w"], cp["bank_scale"], cp["bank_shift"],
              cp["p1_w"], cp["p1_scale"], cp["p1_shift"],
              cp["p2_w"], cp["p2_scale"], cp["p2_shift"],
              cp["hw_w"], cp["hw_b"], cp["gru_wih"], cp["gru_bih"]]

    def bcast_spec(a):
        nd = a.ndim
        return pl.BlockSpec(a.shape, lambda b, _nd=nd: (0,) * _nd)

    # TODO(synk): for long sequences, block the time axis with a K//2 halo so the
    # padded input + K*C intermediate fit v7x's 64 MiB VMEM with double buffering.
    return pl.pallas_call(
        make_cbhg_kernel(T, C, K, n_hw),
        out_shape=jax.ShapeDtypeStruct((B, T, H6), jnp.float32),
        grid=(B,),
        in_specs=[pl.BlockSpec((1, T, C), lambda b: (b, 0, 0))]
                 + [bcast_spec(a) for a in arrays],
        out_specs=pl.BlockSpec((1, T, H6), lambda b: (b, 0, 0)),
        compiler_params=pltpu.CompilerParams(dimension_semantics=("parallel",)),
    )(prenet_out, *arrays)


def bigru_recurrence(gx_tbc, whh_blk, bhh_cat, H):
    T, B, _ = gx_tbc.shape
    of, ob = pl.pallas_call(
        make_bigru_kernel(T, B, H),
        out_shape=(jax.ShapeDtypeStruct((T, B, H), jnp.float32),
                   jax.ShapeDtypeStruct((T, B, H), jnp.float32)),
        scratch_shapes=[pltpu.VMEM((B, 2 * H), jnp.float32)],
    )(gx_tbc, whh_blk, bhh_cat)
    return jnp.concatenate([of, ob], axis=-1)                       # (T, B, 2H)


# --------------------------- Encoder forward --------------------------------

def encoder_forward(params, ids):
    B, T = ids.shape

    # Kernel 1: embedding + prenet (fused)
    x = embed_prenet(ids.reshape(-1), params["embedding"], params["prenet"])
    C = x.shape[-1]
    prenet_out = x.reshape(B, T, C)

    # Kernel 2: CBHG conv bank / maxpool / projections / residual / highways
    #           + GRU input projection, all fused per batch element.
    gx = cbhg_gru_input(prenet_out, params["cbhg"])                 # (B, T, 6H)

    # Kernel 3: bidirectional GRU recurrence.
    gx_tbc = jnp.transpose(gx, (1, 0, 2))                           # (T, B, 6H)
    out = bigru_recurrence(gx_tbc, params["gru"]["whh"],
                           params["gru"]["bhh"], params["gru"]["H"])
    return jnp.transpose(out, (1, 0, 2))                            # (B, T, 2H)


# --------------------------- deterministic params ---------------------------

def init_params(key, cfg):
    num_char = cfg["num_char"]
    E = cfg["text_embed_size"]
    prenet_sizes = list(cfg["dur_prenet_size"])
    C = cfg["dur_encoder_size"]
    K = cfg["dur_encoder_K"]
    n_hw = cfg["dur_num_highways"]
    H = C
    bf = jnp.bfloat16

    keys = iter(jax.random.split(key, 128))

    def nrm(shape, scale=0.1, dtype=jnp.float32):
        return (scale * jax.random.normal(next(keys), shape, dtype=jnp.float32)).astype(dtype)

    eps = 1e-5

    def bn(cout):  # fold eval-mode BatchNorm into per-channel scale/shift (f32)
        gamma = 1.0 + nrm((1, cout), 0.01)
        beta = nrm((1, cout), 0.01)
        mean = nrm((1, cout), 0.01)
        var = jnp.ones((1, cout), jnp.float32)
        scale = gamma / jnp.sqrt(var + eps)
        shift = beta - mean * scale
        return scale, shift

    params = {}
    params["embedding"] = nrm((num_char, E), 0.3, bf)

    prenet = []
    in_sizes = [E] + prenet_sizes[:-1]
    for i, o in zip(in_sizes, prenet_sizes):
        prenet.append((nrm((i, o), 0.1, bf), nrm((1, o), 0.01)))
    params["prenet"] = prenet
    assert prenet_sizes[-1] == C  # residual path requires prenet output dim == encoder size

    # conv bank: per-k (k, C, C) weights concatenated along the tap axis -> (sum_k, C, C)
    bank_w = jnp.concatenate([nrm((k, C, C)) for k in range(1, K + 1)], axis=0).astype(bf)
    bank_scales, bank_shifts = [], []
    for _ in range(K):
        s, sh = bn(C)
        bank_scales.append(s)
        bank_shifts.append(sh)
    bank_scale = jnp.concatenate(bank_scales, axis=-1)              # (1, K*C)
    bank_shift = jnp.concatenate(bank_shifts, axis=-1)

    p1_w = nrm((3, K * C, C), 0.1, bf)
    p1_scale, p1_shift = bn(C)
    p2_w = nrm((3, C, C), 0.1, bf)
    p2_scale, p2_shift = bn(C)

    # highways: merged [Wh | Wt] (C, 2C), bias [0 | -1]
    hw_w = jnp.stack([jnp.concatenate([nrm((C, C)), nrm((C, C))], axis=1)
                      for _ in range(n_hw)], axis=0).astype(bf)     # (n_hw, C, 2C)
    hw_b = jnp.stack([jnp.concatenate([jnp.zeros((1, C), jnp.float32),
                                       -jnp.ones((1, C), jnp.float32)], axis=1)
                      for _ in range(n_hw)], axis=0)                # (n_hw, 1, 2C)

    # GRU: fused input weights [fwd r|z|n | bwd r|z|n], block-diag hidden weights
    wih_cat = jnp.concatenate([nrm((C, 3 * H)), nrm((C, 3 * H))], axis=1).astype(bf)  # (C, 6H)
    bih_cat = jnp.concatenate([nrm((1, 3 * H), 0.01), nrm((1, 3 * H), 0.01)], axis=1)
    whh_f = nrm((H, 3 * H))
    whh_b = nrm((H, 3 * H))
    zeros = jnp.zeros((H, 3 * H), jnp.float32)
    whh_blk = jnp.concatenate(
        [jnp.concatenate([whh_f, zeros], axis=1),
         jnp.concatenate([zeros, whh_b], axis=1)], axis=0).astype(bf)                 # (2H, 6H)
    bhh_cat = jnp.concatenate([nrm((1, 3 * H), 0.01), nrm((1, 3 * H), 0.01)], axis=1)

    params["cbhg"] = dict(K=K, bank_w=bank_w, bank_scale=bank_scale, bank_shift=bank_shift,
                          p1_w=p1_w, p1_scale=p1_scale, p1_shift=p1_shift,
                          p2_w=p2_w, p2_scale=p2_scale, p2_shift=p2_shift,
                          hw_w=hw_w, hw_b=hw_b, gru_wih=wih_cat, gru_bih=bih_cat)
    params["gru"] = dict(whh=whh_blk, bhh=bhh_cat, H=H)
    return params


if __name__ == "__main__":
    cfg = dict(num_char=40, text_embed_size=32, dur_prenet_size=[64, 32],
               dur_encoder_size=32, dur_encoder_K=4, dur_num_highways=2)
    key = jax.random.PRNGKey(0)
    pkey, ikey = jax.random.split(key)
    params = init_params(pkey, cfg)

    B, T = 2, 8
    ids = jax.random.randint(ikey, (B, T), 0, cfg["num_char"], dtype=jnp.int32)

    out = jax.block_until_ready(encoder_forward(params, ids))

    assert out.shape == (B, T, 2 * cfg["dur_encoder_size"]), out.shape
    assert bool(jnp.all(jnp.isfinite(out)))
    print("KERNEL_OK")
</pallas_src>

<mosaic_0001>
module attributes {stable_mosaic.version = 11 : i64} {
  func.func @kernel(%arg0: memref<16x1xi32, #tpu.memory_space<vmem>>, %arg1: memref<40x32xbf16, #tpu.memory_space<vmem>>, %arg2: memref<32x64xbf16, #tpu.memory_space<vmem>>, %arg3: memref<1x64xf32, #tpu.memory_space<vmem>>, %arg4: memref<64x32xbf16, #tpu.memory_space<vmem>>, %arg5: memref<1x32xf32, #tpu.memory_space<vmem>>, %arg6: memref<16x32xf32, #tpu.memory_space<vmem>>) attributes {dimension_semantics = [], scalar_prefetch = 0 : i64, scratch_operands = 0 : i64, tpu.core_type = #tpu.core_type<tc>} {
    %c0 = arith.constant 0 : index
    %c0_0 = arith.constant 0 : index
    %0 = vector.load %arg0[%c0, %c0_0] : memref<16x1xi32, #tpu.memory_space<vmem>>, vector<16x1xi32>
    %1 = tpu.iota {dimensions = array<i32: 1>} : vector<16x40xi32>
    %2 = vector.broadcast %0 : vector<16x1xi32> to vector<16x40xi32>
    %3 = arith.cmpi eq, %1, %2 : vector<16x40xi32>
    %4 = arith.extui %3 : vector<16x40xi1> to vector<16x40xi32>
    %5 = arith.sitofp %4 : vector<16x40xi32> to vector<16x40xf32>
    %6 = arith.truncf %5 : vector<16x40xf32> to vector<16x40xbf16>
    %c0_1 = arith.constant 0 : index
    %c0_2 = arith.constant 0 : index
    %7 = vector.load %arg1[%c0_1, %c0_2] : memref<40x32xbf16, #tpu.memory_space<vmem>>, vector<40x32xbf16>
    %cst = arith.constant dense<0.000000e+00> : vector<16x32xf32>
    %8 = tpu.matmul %6, %7, %cst {dimension_numbers = #tpu.dot_dimension_numbers<[1], [0], [0], [1], [0, 0, 1, 1], [], []>} : vector<16x40xbf16>, vector<40x32xbf16>, vector<16x32xf32> -> vector<16x32xf32>
    %c0_3 = arith.constant 0 : index
    %c0_4 = arith.constant 0 : index
    %9 = vector.load %arg2[%c0_3, %c0_4] : memref<32x64xbf16, #tpu.memory_space<vmem>>, vector<32x64xbf16>
    %c0_5 = arith.constant 0 : index
    %c0_6 = arith.constant 0 : index
    %10 = vector.load %arg3[%c0_5, %c0_6] : memref<1x64xf32, #tpu.memory_space<vmem>>, vector<1x64xf32>
    %11 = arith.truncf %8 : vector<16x32xf32> to vector<16x32xbf16>
    %cst_7 = arith.constant dense<0.000000e+00> : vector<16x64xf32>
    %12 = tpu.matmul %11, %9, %cst_7 {dimension_numbers = #tpu.dot_dimension_numbers<[1], [0], [0], [1], [0, 0, 1, 1], [], []>} : vector<16x32xbf16>, vector<32x64xbf16>, vector<16x64xf32> -> vector<16x64xf32>
    %13 = vector.broadcast %10 : vector<1x64xf32> to vector<16x64xf32>
    %14 = arith.addf %12, %13 : vector<16x64xf32>
    %cst_8 = arith.constant 0.000000e+00 : f32
    %15 = vector.broadcast %cst_8 : f32 to vector<16x64xf32>
    %16 = arith.maximumf %14, %15 : vector<16x64xf32>
    %c0_9 = arith.constant 0 : index
    %c0_10 = arith.constant 0 : index
    %17 = vector.load %arg4[%c0_9, %c0_10] : memref<64x32xbf16, #tpu.memory_space<vmem>>, vector<64x32xbf16>
    %c0_11 = arith.constant 0 : index
    %c0_12 = arith.constant 0 : index
    %18 = vector.load %arg5[%c0_11, %c0_12] : memref<1x32xf32, #tpu.memory_space<vmem>>, vector<1x32xf32>
    %19 = arith.truncf %16 : vector<16x64xf32> to vector<16x64xbf16>
    %cst_13 = arith.constant dense<0.000000e+00> : vector<16x32xf32>
    %20 = tpu.matmul %19, %17, %cst_13 {dimension_numbers = #tpu.dot_dimension_numbers<[1], [0], [0], [1], [0, 0, 1, 1], [], []>} : vector<16x64xbf16>, vector<64x32xbf16>, vector<16x32xf32> -> vector<16x32xf32>
    %21 = vector.broadcast %18 : vector<1x32xf32> to vector<16x32xf32>
    %22 = arith.addf %20, %21 : vector<16x32xf32>
    %cst_14 = arith.constant 0.000000e+00 : f32
    %23 = vector.broadcast %cst_14 : f32 to vector<16x32xf32>
    %24 = arith.maximumf %22, %23 : vector<16x32xf32>
    %c0_15 = arith.constant 0 : index
    %c0_16 = arith.constant 0 : index
    %25 = vector.load %arg6[%c0_15, %c0_16] : memref<16x32xf32, #tpu.memory_space<vmem>>, vector<16x32xf32>
    tpu.vector_store %arg6[%c0_15, %c0_16], %24 {strides = array<i32>} : memref<16x32xf32, #tpu.memory_space<vmem>>, vector<16x32xf32>,
    return
  }
}

</mosaic_0001>

<llo_original>
// kernel: tpu_custom_call.1
$region0: #{tpu_custom_call.1}
  #allocation0 [shape = 'u32[]', space=smem, size = 0x4, offset = 0x4, fixed_abs, tag = 'smem constant byte address 0x4 - core index']
  #allocation1 [shape = 'u32[144,128]{1,0:T(1,128)}', space=vmem, size = 0x12000, scoped, tag = 'internal scratch']
  %s0 = inlined_call_operand.vmem [shape: s32[16,1], index: 0, kind: input, shape index: {}]
  %s1 = inlined_call_operand.vmem [shape: bf16[40,32], index: 1, kind: input, shape index: {}]
  %s2 = inlined_call_operand.vmem [shape: bf16[32,64], index: 2, kind: input, shape index: {}]
  %s3 = inlined_call_operand.vmem [shape: f32[1,64], index: 3, kind: input, shape index: {}]
  %s4 = inlined_call_operand.vmem [shape: bf16[64,32], index: 4, kind: input, shape index: {}]
  %s5 = inlined_call_operand.vmem [shape: f32[1,32], index: 5, kind: input, shape index: {}]
  %s6 = inlined_call_operand.hbm [shape: f32[16,32], index: 6, kind: output, shape index: {}]
  %s7 = sld [smem:[#allocation0]]
  $region34: #{tpu_custom_call.1} parent=0
    _
  %s9 = ssub.s32 1, %s7
  %s10 = scalar_select 0, %s9, %s7
  $region1: #{tpu_custom_call.1} parent=0
    #allocation2 [shape = 'u8[8192]{0}', space=vmem, size = 0x2000, scoped, tag = 'output window, operand 0, single buffered']
    #allocation3 [shape = 's32[1]{0}', space=sflag, size = 0x4, scoped, tag = 'scoped memory for tpu_custom_call.1']
    %11 = vsyncpa [#allocation3], 0
    // Predicated region
    $region2: #{tpu_custom_call.1} parent=1 // pred_check
      _
    $region3: #{tpu_custom_call.1} parent=1 // pred_check_branch
      %13 = sbr.rel (0) target = $region5
    $region4: #{tpu_custom_call.1} parent=1 // pred_region
      _
    $region5: #{tpu_custom_call.1} parent=1 // pred_fallthru
      _
    // Predicated region
    $region6: #{tpu_custom_call.1} parent=1 // pred_check
      _
    $region7: #{tpu_custom_call.1} parent=1 // pred_check_branch
      %15 = sbr.rel (0) target = $region9
    $region8: #{tpu_custom_call.1} parent=1 // pred_region
      _
    $region9: #{tpu_custom_call.1} parent=1 // pred_fallthru
      _
    // Predicated region
    $region10: #{tpu_custom_call.1} parent=1 // pred_check
      _
    $region11: #{tpu_custom_call.1} parent=1 // pred_check_branch
      %17 = sbr.rel (0) target = $region13
    $region12: #{tpu_custom_call.1} parent=1 // pred_region
      _
    $region13: #{tpu_custom_call.1} parent=1 // pred_fallthru
      _
    // Predicated region
    $region14: #{tpu_custom_call.1} parent=1 // pred_check
      _
    $region15: #{tpu_custom_call.1} parent=1 // pred_check_branch
      %19 = sbr.rel (0) target = $region17
    $region16: #{tpu_custom_call.1} parent=1 // pred_region
      _
    $region17: #{tpu_custom_call.1} parent=1 // pred_fallthru
      _
    // Predicated region
    $region18: #{tpu_custom_call.1} parent=1 // pred_check
      _
    $region19: #{tpu_custom_call.1} parent=1 // pred_check_branch
      %21 = sbr.rel (0) target = $region21
    $region20: #{tpu_custom_call.1} parent=1 // pred_region
      _
    $region21: #{tpu_custom_call.1} parent=1 // pred_fallthru
      _
    // Predicated region
    $region22: #{tpu_custom_call.1} parent=1 // pred_check
      _
    $region23: #{tpu_custom_call.1} parent=1 // pred_check_branch
      %23 = sbr.rel (0) target = $region25
    $region24: #{tpu_custom_call.1} parent=1 // pred_region
      _
    $region25: #{tpu_custom_call.1} parent=1 // pred_fallthru
      _
    %v25 = vld [vmem:[%s0] sm:$0xff]
    %v26 = vld [vmem:[%s0 + $0x8] sm:$0xff]
    %v27 = vlaneseq
    %v28 = vand.u32 %v27, 127
    %29 = vset.pattern.permute.xlu0 0
    %30 = vperm.xlu0 %29, %v25
    %v31 = vpop.permute.xlu0 %30
    %32 = vset.pattern.permute.xlu0 0
    %33 = vperm.xlu0 %32, %v26
    %v34 = vpop.permute.xlu0 %33
    %vm35 = vcmp.eq.s32.totalorder %v28, %v31
    %vm36 = vcmp.eq.s32.totalorder %v28, %v34
    %v37 = vsel %vm35, 1, 0
    %v38 = vsel %vm36, 1, 0
    %v39 = vcvt.s32.f32 %v37
    %v40 = vcvt.s32.f32 %v38
    %v41 = vpack.c.bf16 %v40, %v39
    %v42 = vld [vmem:[%s1] sm:$0xf]
    %v43 = vld [vmem:[%s1 + $0x4] sm:$0xf]
    %v44 = vld [vmem:[%s1 + $0x8] sm:$0xf]
    %v45 = vld [vmem:[%s1 + $0xc] sm:$0xf]
    %v46 = vld [vmem:[%s1 + $0x10] sm:$0xf]
    %v52 = vunpack.c.l.b16 %v42
    %v53 = vunpack.c.l.b16 %v43
    %v54 = vunpack.c.l.b16 %v44
    %v55 = vunpack.c.l.b16 %v45
    %v56 = vunpack.c.l.b16 %v46
    %v57 = vpack.c.b16 %v53, %v52
    %v58 = vpack.c.b16 %v55, %v54
    %v59 = vpack.c.b16 %v56, %v56
    %vm62 = vcmask 326656
    %v64 = vsel %vm62, %v41, 0
    %vm66 = vcmask 1043456
    %v68 = vsel %vm66, %v59, 0
    %70 = vmatprep.subr.bf16.mxu0 0
    %71 = vmatpush1.bf16.msra.mxu0 %v57
    %72 = vmatprep.subr.bf16.mxu0 0
    %73 = vmatpush1.bf16.msra.mxu0 %v58
    %74 = vmatprep.subr.bf16.mxu0 0
    %75 = vmatpush1.bf16.msra.mxu0 %v68
    %76 = vmatprep.subr.bf16.mxu0 0
    %77 = vmatpush1.bf16.msra.mxu0 0
    %78 = vmatprep.subr.bf16.mxu0 0
    %79 = vmatpush1.bf16.msra.mxu0 0
    %80 = vmatprep.subr.bf16.mxu0 0
    %81 = vmatpush1.bf16.msra.mxu0 0
    %82 = vmatprep.subr.bf16.mxu0 0
    %83 = vmatpush1.bf16.msra.mxu0 0
    %84 = vmatprep.subr.bf16.mxu0 0
    %85 = vmatpush1.bf16.msra.mxu0 0
    %86 = vmatprep.subr.bf16.mxu0 0
    %87 = vmatpush1.bf16.msra.mxu0 0
    %88 = vmatprep.subr.bf16.mxu0 0
    %89 = vmatpush1.bf16.msra.mxu0 0
    %90 = vmatprep.subr.bf16.mxu0 0
    %91 = vmatpush1.bf16.msra.mxu0 0
    %92 = vmatprep.subr.bf16.mxu0 0
    %93 = vmatpush1.bf16.msra.mxu0 0
    %94 = vmatprep.subr.bf16.mxu0 0
    %95 = vmatpush1.bf16.msra.mxu0 0
    %96 = vmatprep.subr.bf16.mxu0 0
    %97 = vmatpush1.bf16.msra.mxu0 0
    %98 = vmatprep.subr.bf16.mxu0 0
    %99 = vmatpush1.bf16.msra.mxu0 0
    %100 = vmatprep.subr.bf16.mxu0 0
    %101 = vmatpush1.bf16.msra.mxu0 0
    %102 = vmatprep.mubr.bf16.mxu0 0
    %103 = vmatmul.mubr.bf16.gmra.mrb[0].mxu0 %v64
    %v104 = vpop.f32.mrb[0].mxu0
    %v105 = vadd.f32 0.0, %v104
    %v106 = vpop.f32.mrb[0].mxu0
    %v107 = vpop.f32.mrb[0].mxu0
    %v108 = vadd.f32 0.0, %v107
    %v109 = vpop.f32.mrb[0].mxu0
    %110 = vdwg.mxu0
    %v111 = vld [vmem:[%s2] sm:$0xf]
    %v112 = vld [vmem:[%s2 + $0x4] sm:$0xf]
    %v113 = vld [vmem:[%s2 + $0x8] sm:$0xf]
    %v114 = vld [vmem:[%s2 + $0xc] sm:$0xf]
    %v115 = vld [vmem:[%s3] sm:$0x1]
    %v116 = vpack.c.bf16 %v108, %v105
    %v118 = vlaneseq
    %v119 = vshrl.u32 %v118, 7
    %v120 = vsub.s32 0, %v119
    %v121 = vrot.slane %v115, %v120
    %v127 = vunpack.c.l.b16 %v111
    %v128 = vunpack.c.l.b16 %v112
    %v129 = vunpack.c.l.b16 %v113
    %v130 = vunpack.c.l.b16 %v114
    %v131 = vpack.c.b16 %v128, %v127
    %v132 = vpack.c.b16 %v130, %v129
    %vm135 = vcmask 261120
    %v137 = vsel %vm135, %v116, 0
    %139 = vmatprep.subr.bf16.mxu0 0
    %140 = vmatpush1.bf16.msra.mxu0 %v131
    %141 = vmatprep.subr.bf16.mxu0 0
    %142 = vmatpush1.bf16.msra.mxu0 %v132
    %143 = vmatprep.subr.bf16.mxu0 0
    %144 = vmatpush1.bf16.msra.mxu0 0
    %145 = vmatprep.subr.bf16.mxu0 0
    %146 = vmatpush1.bf16.msra.mxu0 0
    %147 = vmatprep.subr.bf16.mxu0 0
    %148 = vmatpush1.bf16.msra.mxu0 0
    %149 = vmatprep.subr.bf16.mxu0 0
    %150 = vmatpush1.bf16.msra.mxu0 0
    %151 = vmatprep.subr.bf16.mxu0 0
    %152 = vmatpush1.bf16.msra.mxu0 0
    %153 = vmatprep.subr.bf16.mxu0 0
    %154 = vmatpush1.bf16.msra.mxu0 0
    %155 = vmatprep.subr.bf16.mxu0 0
    %156 = vmatpush1.bf16.msra.mxu0 0
    %157 = vmatprep.subr.bf16.mxu0 0
    %158 = vmatpush1.bf16.msra.mxu0 0
    %159 = vmatprep.subr.bf16.mxu0 0
    %160 = vmatpush1.bf16.msra.mxu0 0
    %161 = vmatprep.subr.bf16.mxu0 0
    %162 = vmatpush1.bf16.msra.mxu0 0
    %163 = vmatprep.subr.bf16.mxu0 0
    %164 = vmatpush1.bf16.msra.mxu0 0
    %165 = vmatprep.subr.bf16.mxu0 0
    %166 = vmatpush1.bf16.msra.mxu0 0
    %167 = vmatprep.subr.bf16.mxu0 0
    %168 = vmatpush1.bf16.msra.mxu0 0
    %169 = vmatprep.subr.bf16.mxu0 0
    %170 = vmatpush1.bf16.msra.mxu0 0
    %171 = vmatprep.mubr.bf16.mxu0 0
    %172 = vmatmul.mubr.bf16.gmra.mrb[0].mxu0 %v137
    %v173 = vpop.f32.mrb[0].mxu0
    %v174 = vadd.f32 %v121, %v173
    %v175 = vpop.f32.mrb[0].mxu0
    %v176 = vpop.f32.mrb[0].mxu0
    %v177 = vadd.f32 %v121, %v176
    %v178 = vpop.f32.mrb[0].mxu0
    %179 = vdwg.mxu0
    %v180 = vmax.f32 %v174, 0.0
    %v181 = vmax.f32 %v177, 0.0
    %v182 = vld [vmem:[%s4] sm:$0xf]
    %v183 = vld [vmem:[%s4 + $0x4] sm:$0xf]
    %v184 = vld [vmem:[%s4 + $0x8] sm:$0xf]
    %v185 = vld [vmem:[%s4 + $0xc] sm:$0xf]
    %v186 = vld [vmem:[%s4 + $0x10] sm:$0xf]
    %v187 = vld [vmem:[%s4 + $0x14] sm:$0xf]
    %v188 = vld [vmem:[%s4 + $0x18] sm:$0xf]
    %v189 = vld [vmem:[%s4 + $0x1c] sm:$0xf]
    %v190 = vld [vmem:[%s5] sm:$0x1]
    %v191 = vpack.c.bf16 %v181, %v180
    %v193 = vlaneseq
    %v194 = vshrl.u32 %v193, 7
    %v195 = vsub.s32 0, %v194
    %v196 = vrot.slane %v190, %v195
    %v206 = vunpack.c.l.b16 %v182
    %v207 = vunpack.c.l.b16 %v183
    %v208 = vunpack.c.l.b16 %v184
    %v209 = vunpack.c.l.b16 %v185
    %v210 = vunpack.c.l.b16 %v186
    %v211 = vunpack.c.l.b16 %v187
    %v212 = vunpack.c.l.b16 %v188
    %v213 = vunpack.c.l.b16 %v189
    %v214 = vpack.c.b16 %v207, %v206
    %v215 = vpack.c.b16 %v209, %v208
    %v216 = vpack.c.b16 %v211, %v210
    %v217 = vpack.c.b16 %v213, %v212
    %vm222 = vcmask 523264
    %v224 = vsel %vm222, %v191, 0
    %226 = vmatprep.subr.bf16.mxu0 0
    %227 = vmatpush1.bf16.msra.mxu0 %v214
    %228 = vmatprep.subr.bf16.mxu0 0
    %229 = vmatpush1.bf16.msra.mxu0 %v215
    %230 = vmatprep.subr.bf16.mxu0 0
    %231 = vmatpush1.bf16.msra.mxu0 %v216
    %232 = vmatprep.subr.bf16.mxu0 0
    %233 = vmatpush1.bf16.msra.mxu0 %v217
    %234 = vmatprep.subr.bf16.mxu0 0
    %235 = vmatpush1.bf16.msra.mxu0 0
    %236 = vmatprep.subr.bf16.mxu0 0
    %237 = vmatpush1.bf16.msra.mxu0 0
    %238 = vmatprep.subr.bf16.mxu0 0
    %239 = vmatpush1.bf16.msra.mxu0 0
    %240 = vmatprep.subr.bf16.mxu0 0
    %241 = vmatpush1.bf16.msra.mxu0 0
    %242 = vmatprep.subr.bf16.mxu0 0
    %243 = vmatpush1.bf16.msra.mxu0 0
    %244 = vmatprep.subr.bf16.mxu0 0
    %245 = vmatpush1.bf16.msra.mxu0 0
    %246 = vmatprep.subr.bf16.mxu0 0
    %247 = vmatpush1.bf16.msra.mxu0 0
    %248 = vmatprep.subr.bf16.mxu0 0
    %249 = vmatpush1.bf16.msra.mxu0 0
    %250 = vmatprep.subr.bf16.mxu0 0
    %251 = vmatpush1.bf16.msra.mxu0 0
    %252 = vmatprep.subr.bf16.mxu0 0
    %253 = vmatpush1.bf16.msra.mxu0 0
    %254 = vmatprep.subr.bf16.mxu0 0
    %255 = vmatpush1.bf16.msra.mxu0 0
    %256 = vmatprep.subr.bf16.mxu0 0
    %257 = vmatpush1.bf16.msra.mxu0 0
    %258 = vmatprep.mubr.bf16.mxu0 0
    %259 = vmatmul.mubr.bf16.gmra.mrb[0].mxu0 %v224
    %v260 = vpop.f32.mrb[0].mxu0
    %v261 = vadd.f32 %v196, %v260
    %v262 = vpop.f32.mrb[0].mxu0
    %v263 = vpop.f32.mrb[0].mxu0
    %v264 = vadd.f32 %v196, %v263
    %v265 = vpop.f32.mrb[0].mxu0
    %266 = vdwg.mxu0
    %v267 = vmax.f32 %v261, 0.0
    %v268 = vmax.f32 %v264, 0.0
    %269 = vst.msk [vmem:[#allocation2] sm:$0xff] %vm135, %v267
    %270 = vst.msk [vmem:[#allocation2 + $0x8] sm:$0xff] %vm135, %v268
    // Predicated region
    $region26: #{tpu_custom_call.1} parent=1 // pred_check
      _
    $region27: #{tpu_custom_call.1} parent=1 // pred_check_branch
      %272 = sbr.rel (0) target = $region29
    $region28: #{tpu_custom_call.1} parent=1 // pred_region
      %s274 = ssub.s32 256, 256
      %275 = vsyncadd [#allocation3], %s274
      %s276 = sshll.u32 [#allocation2], 4
      %s277 = int_to_ptr.vmem [resolvable:$true] %s276
      %282 = dma.vmem_to_hbm [thread:$0]  %s277, 256, %s6, [#allocation3], 128, 128, 8
    $region29: #{tpu_custom_call.1} parent=1 // pred_fallthru
      _
    // Predicated region
    $region30: #{tpu_custom_call.1} parent=1 // pred_check
      _
    $region31: #{tpu_custom_call.1} parent=1 // pred_check_branch
      %284 = sbr.rel (0) target = $region33
    $region32: #{tpu_custom_call.1} parent=1 // pred_region
      %285 = dma.done [#allocation3], 256
    $region33: #{tpu_custom_call.1} parent=1 // pred_fallthru
      _
    %286 = vsyncpa [#allocation3], 1

</llo_original>
